<compile_context>
chip_gen: v7x
topology: tpu7x:2x2x1
jax: 0.10.0
libtpu: 0.0.40
codegen_flags: <defaults>
</compile_context>

<pallas_src>
import math
import functools

import jax
import jax.numpy as jnp
from jax.experimental import pallas as pl
from jax.experimental.pallas import tpu as pltpu


def _round_up(x, m):
    return ((x + m - 1) // m) * m


def _sublane_align(dtype):
    # f32 -> 8, bf16 -> 16, int8/fp8 -> 32 (sub-32-bit dtypes pack along sublanes).
    return max(8, 32 // jnp.dtype(dtype).itemsize)


def _pad2(a, rows, cols):
    pr, pc = rows - a.shape[0], cols - a.shape[1]
    return jnp.pad(a, ((0, pr), (0, pc))) if (pr or pc) else a


# ---------------------------------------------------------------------------
# Kernels.  Grid = (i over M tiles, j over fan_out tiles, k over fan_in tiles);
# k is the innermost reduction axis ("arbitrary"), i and j are "parallel".
# ---------------------------------------------------------------------------
def _lora_linear_kernel(x_ref, w_ref, xa_ref, bsc_ref, bias_ref, o_ref, acc_ref):
    k = pl.program_id(2)

    @pl.when(k == 0)
    def _init():
        acc_ref[...] = jnp.zeros_like(acc_ref)

    acc_ref[...] += jnp.dot(x_ref[...], w_ref[...],
                            preferred_element_type=jnp.float32)

    @pl.when(k == pl.num_programs(2) - 1)
    def _finalize():
        # xa (= x @ A, precomputed in the wrapper) and B*scaling share the
        # weight dtype -> single dtype-consistent MXU pass with f32 accumulate.
        lora = jnp.dot(xa_ref[...], bsc_ref[...],
                       preferred_element_type=jnp.float32)
        o_ref[...] = (acc_ref[...] + lora + bias_ref[...]).astype(o_ref.dtype)


def _plain_linear_kernel(x_ref, w_ref, bias_ref, o_ref, acc_ref):
    k = pl.program_id(2)

    @pl.when(k == 0)
    def _init():
        acc_ref[...] = jnp.zeros_like(acc_ref)

    acc_ref[...] += jnp.dot(x_ref[...], w_ref[...],
                            preferred_element_type=jnp.float32)

    @pl.when(k == pl.num_programs(2) - 1)
    def _finalize():
        o_ref[...] = (acc_ref[...] + bias_ref[...]).astype(o_ref.dtype)


# ---------------------------------------------------------------------------
# Wrapper: prepare (pad / fold scaling) once, return a jitted apply(x).
# ---------------------------------------------------------------------------
def make_lora_linear(weight, lora_A, lora_B, bias, *, scaling,
                     block_m=512, block_n=None, block_k=None):
    """Returns apply(x): (..., fan_in) -> (..., fan_out)."""
    fan_in, fan_out = weight.shape
    w_dtype = weight.dtype
    has_lora = (lora_A is not None and lora_B is not None
                and lora_A.shape[1] > 0)

    # ---- Tile sizes (fan_in / fan_out; M tile is chosen per-call) ----------
    n128 = _round_up(fan_out, 128)
    TN = block_n if block_n is not None else (256 if n128 % 256 == 0 else 128)
    N_pad = _round_up(fan_out, TN)

    if block_k is not None:
        TK = block_k
    elif fan_in <= 1024:
        TK = _round_up(fan_in, 128)          # single K step
    else:
        TK = 512                             # bounded VMEM for any fan_in
    K_pad = _round_up(fan_in, TK)

    # ---- One-time padding / scaling fold (hoisted out of the hot path) -----
    w_p = _pad2(weight, K_pad, N_pad)
    bias_arr = bias if bias is not None else jnp.zeros((fan_out,), w_dtype)
    bias_p = _pad2(bias_arr.reshape(1, -1).astype(jnp.float32), 1, N_pad)

    if has_lora:
        rank = lora_A.shape[1]
        R_pad = max(_sublane_align(w_dtype), _round_up(rank, _sublane_align(w_dtype)))
        a_p = _pad2(lora_A.astype(w_dtype), K_pad, R_pad)
        bsc_p = _pad2((lora_B * scaling).astype(w_dtype), R_pad, N_pad)
    else:
        R_pad = 0
        a_p = None
        bsc_p = None

    def _apply(x, w_p, bias_p, a_p, bsc_p):
        lead = x.shape[:-1]
        x2 = x.reshape(-1, fan_in)
        M = x2.shape[0]

        sub_m = _sublane_align(x.dtype)
        TM = min(block_m, _round_up(M, sub_m))
        M_pad = _round_up(M, TM)
        x2p = _pad2(x2, M_pad, K_pad)

        out_dtype = jnp.result_type(x.dtype, w_p.dtype)
        grid = (M_pad // TM, N_pad // TN, K_pad // TK)

        # VMEM budget: double-buffered input/output tiles + f32 accumulator.
        xb = jnp.dtype(x.dtype).itemsize
        wb = jnp.dtype(w_p.dtype).itemsize
        ob = jnp.dtype(out_dtype).itemsize
        vmem_bytes = (2 * TM * TK * xb + 2 * TK * TN * wb + 2 * TM * TN * ob
                      + TM * TN * 4 + 2 * (TM * R_pad + R_pad * TN) * wb
                      + 2 * TN * 4)
        vmem_limit = min(max(2 * vmem_bytes, 16 * 1024 * 1024), 48 * 1024 * 1024)

        cparams = pltpu.CompilerParams(
            dimension_semantics=("parallel", "parallel", "arbitrary"),
            vmem_limit_bytes=vmem_limit,
        )

        if a_p is not None:
            # LoRA intermediate: cheap, skinny matmul done once in XLA; cast to
            # the weight dtype so the in-kernel LoRA dot is dtype-consistent.
            xa = jnp.dot(x2p, a_p, preferred_element_type=jnp.float32)
            xa = xa.astype(bsc_p.dtype)

            out = pl.pallas_call(
                _lora_linear_kernel,
                out_shape=jax.ShapeDtypeStruct((M_pad, N_pad), out_dtype),
                grid=grid,
                in_specs=[
                    pl.BlockSpec((TM, TK), lambda i, j, k: (i, k)),       # x
                    pl.BlockSpec((TK, TN), lambda i, j, k: (k, j)),       # W
                    pl.BlockSpec((TM, R_pad), lambda i, j, k: (i, 0)),    # xa
                    pl.BlockSpec((R_pad, TN), lambda i, j, k: (0, j)),    # B*scaling
                    pl.BlockSpec((1, TN), lambda i, j, k: (0, j)),        # bias (f32)
                ],
                out_specs=pl.BlockSpec((TM, TN), lambda i, j, k: (i, j)),
                scratch_shapes=[pltpu.VMEM((TM, TN), jnp.float32)],
                compiler_params=cparams,
            )(x2p, w_p, xa, bsc_p, bias_p)
        else:
            out = pl.pallas_call(
                _plain_linear_kernel,
                out_shape=jax.ShapeDtypeStruct((M_pad, N_pad), out_dtype),
                grid=grid,
                in_specs=[
                    pl.BlockSpec((TM, TK), lambda i, j, k: (i, k)),       # x
                    pl.BlockSpec((TK, TN), lambda i, j, k: (k, j)),       # W
                    pl.BlockSpec((1, TN), lambda i, j, k: (0, j)),        # bias (f32)
                ],
                out_specs=pl.BlockSpec((TM, TN), lambda i, j, k: (i, j)),
                scratch_shapes=[pltpu.VMEM((TM, TN), jnp.float32)],
                compiler_params=cparams,
            )(x2p, w_p, bias_p)

        return out[:M, :fan_out].reshape(*lead, fan_out)

    apply_jit = jax.jit(_apply)

    def apply(x):
        return apply_jit(x, w_p, bias_p, a_p, bsc_p)

    return apply


def init_lora_params(key, fan_in, fan_out, rank, dtype=jnp.float32):
    """Deterministic init mirroring LinearWithLoRA.reset_parameters()."""
    k_w, k_a = jax.random.split(key, 2)
    weight = jax.random.normal(k_w, (fan_in, fan_out), dtype) * (1.0 / math.sqrt(fan_in))
    bias = jnp.zeros((fan_out,), dtype)
    lora_A = jax.random.normal(k_a, (fan_in, rank), dtype) * 0.02
    lora_B = jnp.zeros((rank, fan_out), dtype)
    return weight, bias, lora_A, lora_B


if __name__ == "__main__":
    # Small shapes consistent with the linear layer.
    fan_in, fan_out, rank, alpha = 32, 64, 4, 8
    scaling = alpha / rank

    key = jax.random.PRNGKey(0)
    k_params, k_x = jax.random.split(key)

    weight, bias, lora_A, lora_B = init_lora_params(k_params, fan_in, fan_out, rank)
    # reset_parameters() zeros lora_B; perturb it so the LoRA path is exercised
    # numerically, not just structurally.
    lora_B = lora_B + 0.01 * jax.random.normal(
        jax.random.PRNGKey(1), lora_B.shape, jnp.float32)

    # x: (batch=2, seq=8, fan_in=32)
    x = jax.random.normal(k_x, (2, 8, fan_in), jnp.float32)

    # --- LoRA path (rank > 0, un-merged forward) ------------------------------
    layer = make_lora_linear(weight, lora_A, lora_B, bias, scaling=scaling)
    out = jax.block_until_ready(layer(x))
    ref = x @ weight + (x @ lora_A @ lora_B) * scaling + bias
    assert out.shape == (2, 8, fan_out)
    assert jnp.allclose(out, ref, atol=2e-3, rtol=2e-3), "LoRA path mismatch vs reference"

    # --- rank == 0 path (plain linear kernel, no dead adapter work) -----------
    layer0 = make_lora_linear(weight, None, None, bias, scaling=1.0)
    out0 = jax.block_until_ready(layer0(x))
    ref0 = x @ weight + bias
    assert jnp.allclose(out0, ref0, atol=2e-3, rtol=2e-3), "plain path mismatch vs reference"

    # TODO(synk): merge_weights()/unmerge_weights() are host-side parameter
    # mutations (no forward compute) and are intentionally not kernelized.
    print("KERNEL_OK")
</pallas_src>

<mosaic_0001>
module attributes {stable_mosaic.version = 11 : i64} {
  func.func @_lora_linear_kernel(%arg0: i32, %arg1: i32, %arg2: i32, %arg3: memref<16x128xf32, #tpu.memory_space<vmem>>, %arg4: memref<128x128xf32, #tpu.memory_space<vmem>>, %arg5: memref<16x8xf32, #tpu.memory_space<vmem>>, %arg6: memref<8x128xf32, #tpu.memory_space<vmem>>, %arg7: memref<1x128xf32, #tpu.memory_space<vmem>>, %arg8: memref<16x128xf32, #tpu.memory_space<vmem>>, %arg9: memref<16x128xf32, #tpu.memory_space<vmem>>) attributes {dimension_semantics = [#tpu.dimension_semantics<parallel>, #tpu.dimension_semantics<parallel>, #tpu.dimension_semantics<arbitrary>], iteration_bounds = array<i64: 1, 1, 1>, scalar_prefetch = 0 : i64, scratch_operands = 1 : i64, tpu.core_type = #tpu.core_type<tc>, window_params = [{transform_indices = @transform_0, window_bounds = array<i64: 16, 128>}, {transform_indices = @transform_1, window_bounds = array<i64: 128, 128>}, {transform_indices = @transform_2, window_bounds = array<i64: 16, 8>}, {transform_indices = @transform_3, window_bounds = array<i64: 8, 128>}, {transform_indices = @transform_4, window_bounds = array<i64: 1, 128>}, {transform_indices = @transform_5, window_bounds = array<i64: 16, 128>}]} {
    %c0_i32 = arith.constant 0 : i32
    %0 = arith.cmpi eq, %arg2, %c0_i32 : i32
    %1 = arith.extui %0 : i1 to i32
    %c0_i32_0 = arith.constant 0 : i32
    %2 = arith.cmpi ne, %1, %c0_i32_0 : i32
    scf.if %2 {
      %cst_10 = arith.constant 0.000000e+00 : f32
      %12 = vector.broadcast %cst_10 : f32 to vector<16x128xf32>
      %c0_11 = arith.constant 0 : index
      %c0_12 = arith.constant 0 : index
      %13 = vector.load %arg9[%c0_11, %c0_12] : memref<16x128xf32, #tpu.memory_space<vmem>>, vector<16x128xf32>
      tpu.vector_store %arg9[%c0_11, %c0_12], %12 {strides = array<i32>} : memref<16x128xf32, #tpu.memory_space<vmem>>, vector<16x128xf32>,
    } else {
    }
    %c0 = arith.constant 0 : index
    %c0_1 = arith.constant 0 : index
    %3 = vector.load %arg9[%c0, %c0_1] : memref<16x128xf32, #tpu.memory_space<vmem>>, vector<16x128xf32>
    %c0_2 = arith.constant 0 : index
    %c0_3 = arith.constant 0 : index
    %4 = vector.load %arg3[%c0_2, %c0_3] : memref<16x128xf32, #tpu.memory_space<vmem>>, vector<16x128xf32>
    %c0_4 = arith.constant 0 : index
    %c0_5 = arith.constant 0 : index
    %5 = vector.load %arg4[%c0_4, %c0_5] : memref<128x128xf32, #tpu.memory_space<vmem>>, vector<128x128xf32>
    %cst = arith.constant dense<0.000000e+00> : vector<16x128xf32>
    %6 = tpu.matmul %4, %5, %cst {dimension_numbers = #tpu.dot_dimension_numbers<[1], [0], [0], [1], [0, 0, 1, 1], [], []>} : vector<16x128xf32>, vector<128x128xf32>, vector<16x128xf32> -> vector<16x128xf32>
    %7 = arith.addf %3, %6 : vector<16x128xf32>
    %c0_6 = arith.constant 0 : index
    %c0_7 = arith.constant 0 : index
    %8 = vector.load %arg9[%c0_6, %c0_7] : memref<16x128xf32, #tpu.memory_space<vmem>>, vector<16x128xf32>
    tpu.vector_store %arg9[%c0_6, %c0_7], %7 {strides = array<i32>} : memref<16x128xf32, #tpu.memory_space<vmem>>, vector<16x128xf32>,
    %c0_i32_8 = arith.constant 0 : i32
    %9 = arith.cmpi eq, %arg2, %c0_i32_8 : i32
    %10 = arith.extui %9 : i1 to i32
    %c0_i32_9 = arith.constant 0 : i32
    %11 = arith.cmpi ne, %10, %c0_i32_9 : i32
    scf.if %11 {
      %c0_10 = arith.constant 0 : index
      %c0_11 = arith.constant 0 : index
      %12 = vector.load %arg5[%c0_10, %c0_11] : memref<16x8xf32, #tpu.memory_space<vmem>>, vector<16x8xf32>
      %c0_12 = arith.constant 0 : index
      %c0_13 = arith.constant 0 : index
      %13 = vector.load %arg6[%c0_12, %c0_13] : memref<8x128xf32, #tpu.memory_space<vmem>>, vector<8x128xf32>
      %cst_14 = arith.constant dense<0.000000e+00> : vector<16x128xf32>
      %14 = tpu.matmul %12, %13, %cst_14 {dimension_numbers = #tpu.dot_dimension_numbers<[1], [0], [0], [1], [0, 0, 1, 1], [], []>} : vector<16x8xf32>, vector<8x128xf32>, vector<16x128xf32> -> vector<16x128xf32>
      %c0_15 = arith.constant 0 : index
      %c0_16 = arith.constant 0 : index
      %15 = vector.load %arg9[%c0_15, %c0_16] : memref<16x128xf32, #tpu.memory_space<vmem>>, vector<16x128xf32>
      %16 = arith.addf %15, %14 : vector<16x128xf32>
      %c0_17 = arith.constant 0 : index
      %c0_18 = arith.constant 0 : index
      %17 = vector.load %arg7[%c0_17, %c0_18] : memref<1x128xf32, #tpu.memory_space<vmem>>, vector<1x128xf32>
      %18 = vector.broadcast %17 : vector<1x128xf32> to vector<16x128xf32>
      %19 = arith.addf %16, %18 : vector<16x128xf32>
      %c0_19 = arith.constant 0 : index
      %c0_20 = arith.constant 0 : index
      %20 = vector.load %arg8[%c0_19, %c0_20] : memref<16x128xf32, #tpu.memory_space<vmem>>, vector<16x128xf32>
      tpu.vector_store %arg8[%c0_19, %c0_20], %19 {strides = array<i32>} : memref<16x128xf32, #tpu.memory_space<vmem>>, vector<16x128xf32>,
    } else {
    }
    return
  }
  func.func @transform_0(%arg0: i32, %arg1: i32, %arg2: i32) -> (i32, i32) {
    %c0_i32 = arith.constant 0 : i32
    return %arg0, %arg2 : i32, i32
  }
  func.func @transform_1(%arg0: i32, %arg1: i32, %arg2: i32) -> (i32, i32) {
    %c0_i32 = arith.constant 0 : i32
    return %arg2, %arg1 : i32, i32
  }
  func.func @transform_2(%arg0: i32, %arg1: i32, %arg2: i32) -> (i32, i32) {
    %c0_i32 = arith.constant 0 : i32
    %c0_i32_0 = arith.constant 0 : i32
    return %arg0, %c0_i32 : i32, i32
  }
  func.func @transform_3(%arg0: i32, %arg1: i32, %arg2: i32) -> (i32, i32) {
    %c0_i32 = arith.constant 0 : i32
    %c0_i32_0 = arith.constant 0 : i32
    return %c0_i32, %arg1 : i32, i32
  }
  func.func @transform_4(%arg0: i32, %arg1: i32, %arg2: i32) -> (i32, i32) {
    %c0_i32 = arith.constant 0 : i32
    %c0_i32_0 = arith.constant 0 : i32
    return %c0_i32, %arg1 : i32, i32
  }
  func.func @transform_5(%arg0: i32, %arg1: i32, %arg2: i32) -> (i32, i32) {
    %c0_i32 = arith.constant 0 : i32
    return %arg0, %arg1 : i32, i32
  }
}

</mosaic_0001>

<llo_original>
// kernel: _apply.1
$region0: #{_apply.1}
  #allocation0 [shape = 'u32[]', space=smem, size = 0x4, offset = 0x4, fixed_abs, tag = 'smem constant byte address 0x4 - core index']
  #allocation1 [shape = 'u32[144,128]{1,0:T(1,128)}', space=vmem, size = 0x12000, scoped, tag = 'internal scratch']
  #allocation2 [shape = 'f32[16,128]{1,0:T(8,128)}', space=vmem, size = 0x2000, scoped, tag = 'scratch operand']
  %s0 = inlined_call_operand.vmem [shape: f32[16,128], index: 0, kind: input, shape index: {}]
  %s1 = inlined_call_operand.hbm [shape: f32[128,128], index: 1, kind: input, shape index: {}]
  %s2 = inlined_call_operand.vmem [shape: f32[16,8], index: 2, kind: input, shape index: {}]
  %s3 = inlined_call_operand.vmem [shape: f32[8,128], index: 3, kind: input, shape index: {}]
  %s4 = inlined_call_operand.vmem [shape: f32[1,128], index: 4, kind: input, shape index: {}]
  %s5 = inlined_call_operand.vmem [shape: f32[16,128], index: 5, kind: output, shape index: {}]
  %s6 = sld [smem:[#allocation0]]
  $region42: #{_apply.1} parent=0
    _
  %s8 = ssub.s32 1, %s6
  %s9 = scalar_select 0, %s8, %s6
  $region1: #{_apply.1} parent=0
    #allocation3 [shape = 'u8[65536]{0}', space=vmem, size = 0x10000, scoped, tag = 'input window, operand 1, single buffered']
    #allocation4 [shape = 's32[1]{0}', space=sflag, size = 0x4, scoped, tag = 'scoped memory for _apply.1']
    %10 = vsyncpa [#allocation4], 0
    // Predicated region
    $region2: #{_apply.1} parent=1 // pred_check
      _
    $region3: #{_apply.1} parent=1 // pred_check_branch
      %12 = sbr.rel (0) target = $region5
    $region4: #{_apply.1} parent=1 // pred_region
      _
    $region5: #{_apply.1} parent=1 // pred_fallthru
      _
    // Predicated region
    $region6: #{_apply.1} parent=1 // pred_check
      _
    $region7: #{_apply.1} parent=1 // pred_check_branch
      %14 = sbr.rel (0) target = $region9
    $region8: #{_apply.1} parent=1 // pred_region
      %s16 = ssub.s32 2048, 2048
      %17 = vsyncadd [#allocation4], %s16
      %s18 = sshll.u32 [#allocation3], 4
      %s19 = int_to_ptr.vmem [resolvable:$true] %s18
      %24 = dma.hbm_to_vmem [thread:$0]  %s1, 2048, %s19, [#allocation4], 128, 128, 8
    $region9: #{_apply.1} parent=1 // pred_fallthru
      _
    // Predicated region
    $region10: #{_apply.1} parent=1 // pred_check
      _
    $region11: #{_apply.1} parent=1 // pred_check_branch
      %26 = sbr.rel (0) target = $region13
    $region12: #{_apply.1} parent=1 // pred_region
      _
    $region13: #{_apply.1} parent=1 // pred_fallthru
      _
    // Predicated region
    $region14: #{_apply.1} parent=1 // pred_check
      _
    $region15: #{_apply.1} parent=1 // pred_check_branch
      %28 = sbr.rel (0) target = $region17
    $region16: #{_apply.1} parent=1 // pred_region
      _
    $region17: #{_apply.1} parent=1 // pred_fallthru
      _
    // Predicated region
    $region18: #{_apply.1} parent=1 // pred_check
      _
    $region19: #{_apply.1} parent=1 // pred_check_branch
      %30 = sbr.rel (0) target = $region21
    $region20: #{_apply.1} parent=1 // pred_region
      _
    $region21: #{_apply.1} parent=1 // pred_fallthru
      _
    // Predicated region
    $region22: #{_apply.1} parent=1 // pred_check
      _
    $region23: #{_apply.1} parent=1 // pred_check_branch
      %32 = sbr.rel (0) target = $region25
    $region24: #{_apply.1} parent=1 // pred_region
      %33 = dma.done [#allocation4], 2048
    $region25: #{_apply.1} parent=1 // pred_fallthru
      _
    %p34 = scmp.eq.s32.totalorder 0, 0
    // Predicated region
    $region26: #{_apply.1} parent=1 // pred_check
      %p35 = pneg %p34
    $region27: #{_apply.1} parent=1 // pred_check_branch
      %37 = sbr.rel (%p35) target = $region29
    $region28: #{_apply.1} parent=1 // pred_region
      %38 = vst [vmem:[#allocation2] sm:$0xff] 0.0
      %39 = vst [vmem:[#allocation2 + $0x8] sm:$0xff] 0.0
    $region29: #{_apply.1} parent=1 // pred_fallthru
      _
    %v40 = vld [vmem:[#allocation2] sm:$0xff]
    %v41 = vld [vmem:[#allocation2 + $0x8] sm:$0xff]
    %v42 = vld [vmem:[%s0] sm:$0xff]
    %v43 = vld [vmem:[%s0 + $0x8] sm:$0xff]
    %v44 = vld [vmem:[#allocation3] sm:$0xff]
    %v45 = vld [vmem:[#allocation3 + $0x8] sm:$0xff]
    %v46 = vld [vmem:[#allocation3 + $0x10] sm:$0xff]
    %v47 = vld [vmem:[#allocation3 + $0x18] sm:$0xff]
    %v48 = vld [vmem:[#allocation3 + $0x20] sm:$0xff]
    %v49 = vld [vmem:[#allocation3 + $0x28] sm:$0xff]
    %v50 = vld [vmem:[#allocation3 + $0x30] sm:$0xff]
    %v51 = vld [vmem:[#allocation3 + $0x38] sm:$0xff]
    %v52 = vld [vmem:[#allocation3 + $0x40] sm:$0xff]
    %v53 = vld [vmem:[#allocation3 + $0x48] sm:$0xff]
    %v54 = vld [vmem:[#allocation3 + $0x50] sm:$0xff]
    %v55 = vld [vmem:[#allocation3 + $0x58] sm:$0xff]
    %v56 = vld [vmem:[#allocation3 + $0x60] sm:$0xff]
    %v57 = vld [vmem:[#allocation3 + $0x68] sm:$0xff]
    %v58 = vld [vmem:[#allocation3 + $0x70] sm:$0xff]
    %v59 = vld [vmem:[#allocation3 + $0x78] sm:$0xff]
    %60 = vmatprep.subr.mxu0 0.0
    %61 = vmatpush1.msra.mxu0 %v44
    %62 = vmatprep.subr.mxu0 0.0
    %63 = vmatpush1.msra.mxu0 %v45
    %64 = vmatprep.subr.mxu0 0.0
    %65 = vmatpush1.msra.mxu0 %v46
    %66 = vmatprep.subr.mxu0 0.0
    %67 = vmatpush1.msra.mxu0 %v47
    %68 = vmatprep.subr.mxu0 0.0
    %69 = vmatpush1.msra.mxu0 %v48
    %70 = vmatprep.subr.mxu0 0.0
    %71 = vmatpush1.msra.mxu0 %v49
    %72 = vmatprep.subr.mxu0 0.0
    %73 = vmatpush1.msra.mxu0 %v50
    %74 = vmatprep.subr.mxu0 0.0
    %75 = vmatpush1.msra.mxu0 %v51
    %76 = vmatprep.subr.mxu0 0.0
    %77 = vmatpush1.msra.mxu0 %v52
    %78 = vmatprep.subr.mxu0 0.0
    %79 = vmatpush1.msra.mxu0 %v53
    %80 = vmatprep.subr.mxu0 0.0
    %81 = vmatpush1.msra.mxu0 %v54
    %82 = vmatprep.subr.mxu0 0.0
    %83 = vmatpush1.msra.mxu0 %v55
    %84 = vmatprep.subr.mxu0 0.0
    %85 = vmatpush1.msra.mxu0 %v56
    %86 = vmatprep.subr.mxu0 0.0
    %87 = vmatpush1.msra.mxu0 %v57
    %88 = vmatprep.subr.mxu0 0.0
    %89 = vmatpush1.msra.mxu0 %v58
    %90 = vmatprep.subr.mxu0 0.0
    %91 = vmatpush1.msra.mxu0 %v59
    %92 = vmatprep.subr.mxu0 0.0
    %93 = vmatpush1.msra.mxu0 0.0
    %94 = vmatprep.subr.mxu0 0.0
    %95 = vmatpush1.msra.mxu0 0.0
    %96 = vmatprep.subr.mxu0 0.0
    %97 = vmatpush1.msra.mxu0 0.0
    %98 = vmatprep.subr.mxu0 0.0
    %99 = vmatpush1.msra.mxu0 0.0
    %100 = vmatprep.subr.mxu0 0.0
    %101 = vmatpush1.msra.mxu0 0.0
    %102 = vmatprep.subr.mxu0 0.0
    %103 = vmatpush1.msra.mxu0 0.0
    %104 = vmatprep.subr.mxu0 0.0
    %105 = vmatpush1.msra.mxu0 0.0
    %106 = vmatprep.subr.mxu0 0.0
    %107 = vmatpush1.msra.mxu0 0.0
    %108 = vmatprep.subr.mxu0 0.0
    %109 = vmatpush1.msra.mxu0 0.0
    %110 = vmatprep.subr.mxu0 0.0
    %111 = vmatpush1.msra.mxu0 0.0
    %112 = vmatprep.subr.mxu0 0.0
    %113 = vmatpush1.msra.mxu0 0.0
    %114 = vmatprep.subr.mxu0 0.0
    %115 = vmatpush1.msra.mxu0 0.0
    %116 = vmatprep.subr.mxu0 0.0
    %117 = vmatpush1.msra.mxu0 0.0
    %118 = vmatprep.subr.mxu0 0.0
    %119 = vmatpush1.msra.mxu0 0.0
    %120 = vmatprep.subr.mxu0 0.0
    %121 = vmatpush1.msra.mxu0 0.0
    %122 = vmatprep.subr.mxu0 0.0
    %123 = vmatpush1.msra.mxu0 0.0
    %124 = vmatprep.mubr.f32.mxu0 0.0
    %125 = vmatmul.mubr.f32.gmra.mrb[0].mxu0 %v42
    %v126 = vpop.f32.mrb[0].mxu0
    %v127 = vadd.f32 0.0, %v126
    %v128 = vpop.f32.mrb[0].mxu0
    %129 = vmatprep.mubr.f32.mxu0 0.0
    %130 = vmatmul.mubr.f32.gmra.mrb[0].mxu0 %v43
    %v131 = vpop.f32.mrb[0].mxu0
    %v132 = vadd.f32 0.0, %v131
    %v133 = vpop.f32.mrb[0].mxu0
    %134 = vdwg.mxu0
    %v135 = vadd.f32 %v40, %v127
    %v136 = vadd.f32 %v41, %v132
    %137 = vst [vmem:[#allocation2] sm:$0xff] %v135
    %138 = vst [vmem:[#allocation2 + $0x8] sm:$0xff] %v136
    // Predicated region
    $region30: #{_apply.1} parent=1 // pred_check
      %p139 = pneg %p34
    $region31: #{_apply.1} parent=1 // pred_check_branch
      %141 = sbr.rel (%p139) target = $region33
    $region32: #{_apply.1} parent=1 // pred_region
      %v142 = vld [vmem:[%s2] sm:$0xff]
      %v143 = vld [vmem:[%s2 + $0x8] sm:$0xff]
      %v144 = vld [vmem:[%s3] sm:$0xff]
      %vm145 = vcmask 64512
      %v147 = vsel %vm145, %v142, 0
      %v150 = vsel %vm145, %v143, 0
      %152 = vmatprep.subr.mxu0 0.0
      %153 = vmatpush1.msra.mxu0 %v144
      %154 = vmatprep.subr.mxu0 0.0
      %155 = vmatpush1.msra.mxu0 0.0
      %156 = vmatprep.subr.mxu0 0.0
      %157 = vmatpush1.msra.mxu0 0.0
      %158 = vmatprep.subr.mxu0 0.0
      %159 = vmatpush1.msra.mxu0 0.0
      %160 = vmatprep.subr.mxu0 0.0
      %161 = vmatpush1.msra.mxu0 0.0
      %162 = vmatprep.subr.mxu0 0.0
      %163 = vmatpush1.msra.mxu0 0.0
      %164 = vmatprep.subr.mxu0 0.0
      %165 = vmatpush1.msra.mxu0 0.0
      %166 = vmatprep.subr.mxu0 0.0
      %167 = vmatpush1.msra.mxu0 0.0
      %168 = vmatprep.subr.mxu0 0.0
      %169 = vmatpush1.msra.mxu0 0.0
      %170 = vmatprep.subr.mxu0 0.0
      %171 = vmatpush1.msra.mxu0 0.0
      %172 = vmatprep.subr.mxu0 0.0
      %173 = vmatpush1.msra.mxu0 0.0
      %174 = vmatprep.subr.mxu0 0.0
      %175 = vmatpush1.msra.mxu0 0.0
      %176 = vmatprep.subr.mxu0 0.0
      %177 = vmatpush1.msra.mxu0 0.0
      %178 = vmatprep.subr.mxu0 0.0
      %179 = vmatpush1.msra.mxu0 0.0
      %180 = vmatprep.subr.mxu0 0.0
      %181 = vmatpush1.msra.mxu0 0.0
      %182 = vmatprep.subr.mxu0 0.0
      %183 = vmatpush1.msra.mxu0 0.0
      %184 = vmatprep.subr.mxu0 0.0
      %185 = vmatpush1.msra.mxu0 0.0
      %186 = vmatprep.subr.mxu0 0.0
      %187 = vmatpush1.msra.mxu0 0.0
      %188 = vmatprep.subr.mxu0 0.0
      %189 = vmatpush1.msra.mxu0 0.0
      %190 = vmatprep.subr.mxu0 0.0
      %191 = vmatpush1.msra.mxu0 0.0
      %192 = vmatprep.subr.mxu0 0.0
      %193 = vmatpush1.msra.mxu0 0.0
      %194 = vmatprep.subr.mxu0 0.0
      %195 = vmatpush1.msra.mxu0 0.0
      %196 = vmatprep.subr.mxu0 0.0
      %197 = vmatpush1.msra.mxu0 0.0
      %198 = vmatprep.subr.mxu0 0.0
      %199 = vmatpush1.msra.mxu0 0.0
      %200 = vmatprep.subr.mxu0 0.0
      %201 = vmatpush1.msra.mxu0 0.0
      %202 = vmatprep.subr.mxu0 0.0
      %203 = vmatpush1.msra.mxu0 0.0
      %204 = vmatprep.subr.mxu0 0.0
      %205 = vmatpush1.msra.mxu0 0.0
      %206 = vmatprep.subr.mxu0 0.0
      %207 = vmatpush1.msra.mxu0 0.0
      %208 = vmatprep.subr.mxu0 0.0
      %209 = vmatpush1.msra.mxu0 0.0
      %210 = vmatprep.subr.mxu0 0.0
      %211 = vmatpush1.msra.mxu0 0.0
      %212 = vmatprep.subr.mxu0 0.0
      %213 = vmatpush1.msra.mxu0 0.0
      %214 = vmatprep.subr.mxu0 0.0
      %215 = vmatpush1.msra.mxu0 0.0
      %216 = vmatprep.mubr.f32.mxu0 0.0
      %217 = vmatmul.mubr.f32.gmra.mrb[0].mxu0 %v147
      %v218 = vpop.f32.mrb[0].mxu0
      %v219 = vadd.f32 0.0, %v218
      %v220 = vpop.f32.mrb[0].mxu0
      %221 = vmatprep.mubr.f32.mxu0 0.0
      %222 = vmatmul.mubr.f32.gmra.mrb[0].mxu0 %v150
      %v223 = vpop.f32.mrb[0].mxu0
      %v224 = vadd.f32 0.0, %v223
      %v225 = vpop.f32.mrb[0].mxu0
      %226 = vdwg.mxu0
      %v227 = vld [vmem:[#allocation2] sm:$0xff]
      %v228 = vld [vmem:[#allocation2 + $0x8] sm:$0xff]
      %v229 = vadd.f32 %v227, %v219
      %v230 = vadd.f32 %v228, %v224
      %v231 = vld [vmem:[%s4] sm:$0x1]
      %v233 = vlaneseq
      %v234 = vshrl.u32 %v233, 7
      %v235 = vsub.s32 0, %v234
      %v236 = vrot.slane %v231, %v235
      %v238 = vadd.f32 %v229, %v236
      %v239 = vadd.f32 %v230, %v236
      %240 = vst [vmem:[%s5] sm:$0xff] %v238
      %241 = vst [vmem:[%s5 + $0x8] sm:$0xff] %v239
    $region33: #{_apply.1} parent=1 // pred_fallthru
      _
    // Predicated region
    $region34: #{_apply.1} parent=1 // pred_check
      _
    $region35: #{_apply.1} parent=1 // pred_check_branch
      %243 = sbr.rel (0) target = $region37
    $region36: #{_apply.1} parent=1 // pred_region
      _
    $region37: #{_apply.1} parent=1 // pred_fallthru
      _
    // Predicated region
    $region38: #{_apply.1} parent=1 // pred_check
      _
    $region39: #{_apply.1} parent=1 // pred_check_branch
      %245 = sbr.rel (0) target = $region41
    $region40: #{_apply.1} parent=1 // pred_region
      _
    $region41: #{_apply.1} parent=1 // pred_fallthru
      _
    %246 = vsyncpa [#allocation4], 1

</llo_original>
